<compile_context>
chip_gen: v5e
topology: v5e:2x2
jax: 0.10.0
libtpu: 0.0.40
codegen_flags: <defaults>
</compile_context>

<pallas_src>
import numpy as np
import jax
import jax.numpy as jnp
from jax.experimental import pallas as pl
from jax.experimental.pallas import tpu as pltpu


def _taps_1d(kernel_size: int, gaussian: bool) -> list:
    """1-D separable taps whose outer product equals the module's 2-D filter."""
    if gaussian:
        mean = (kernel_size - 1) / 2.0
        variance = (kernel_size / 6.0) ** 2.0
        coords = np.arange(kernel_size, dtype=np.float64)
        u = np.exp(-((coords - mean) ** 2) / (2.0 * variance))
        u = u / u.sum()  # outer(u, u) == the torch GaussianFilter 2-D kernel
        return [float(v) for v in u]
    return [1.0 / kernel_size] * kernel_size  # outer == 1/k^2 avg-pool taps


def _band_matrix(n: int, taps) -> np.ndarray:
    """B[i, p] = taps[p - i + pad] inside the band, 0 outside.

    Encodes a 1-D conv with zero padding (count_include_pad=True) so that
    `B @ x` (or `x @ B.T`) is the padded k-tap filter along that axis.
    """
    k = len(taps)
    pad = (k - 1) // 2
    m = np.zeros((n, n), np.float32)
    for d, t in enumerate(taps):
        off = d - pad
        i0, i1 = max(0, -off), min(n, n - off)
        idx = np.arange(i0, i1)
        m[idx, idx + off] = t
    return m


def _make_kernel(*, recursions: int, normalize: bool):
    def kernel(x_ref, bh_ref, aw_ref, o_ref):
        # x_ref: (H, W) one channel plane; bh_ref: (H, H); aw_ref: (W, W).
        x = x_ref[...].astype(jnp.float32)
        bh = bh_ref[...]
        aw = aw_ref[...]

        def low(v):
            # horizontal pass (lane axis) then vertical pass, both on the MXU;
            # zero padding is already baked into the band matrices.
            h = jnp.dot(v, aw, preferred_element_type=jnp.float32,
                        precision=jax.lax.Precision.HIGHEST)
            return jnp.dot(bh, h, preferred_element_type=jnp.float32,
                           precision=jax.lax.Precision.HIGHEST)

        for _ in range(recursions - 1):
            x = low(x)
        out = x - low(x)
        if normalize:
            out = 0.5 + 0.5 * out
        o_ref[...] = out.astype(o_ref.dtype)

    return kernel


def _vmem_limit_bytes(H, W, itemsize):
    plane_in = H * W * itemsize
    plane_f32 = H * W * 4
    band = (H * H + W * W) * 4
    # 2x in + 2x out double buffers, double-buffered band matrices, and a few
    # f32 intermediates inside the kernel (x, h, low, out).
    need = 4 * plane_in + 2 * band + 6 * plane_f32
    try:
        cap = int(pltpu.get_tpu_info().vmem_capacity_bytes)
    except Exception:  # be conservative if the query is unavailable
        cap = 64 * 1024 * 1024
    return int(min(max(2 * need, 16 * 1024 * 1024), (cap * 3) // 4))


def filter_high(img, *, recursions: int = 1, kernel_size: int = 5,
                normalize: bool = True, gaussian: bool = False):
    """Pallas implementation of FilterHigh.forward (stride=1), NCHW in/out."""
    assert kernel_size % 2 == 1, "only odd kernel_size (module default is 5)"
    N, C, H, W = img.shape
    nc = N * C
    taps = _taps_1d(kernel_size, gaussian)

    bh = jnp.asarray(_band_matrix(H, taps))        # (H, H): vertical pass
    aw = jnp.asarray(_band_matrix(W, taps).T)      # (W, W): horizontal pass

    x = img.reshape(nc, H, W)                      # free reshape, W on lanes

    kernel = _make_kernel(recursions=recursions, normalize=normalize)
    vmem_limit = _vmem_limit_bytes(H, W, jnp.dtype(img.dtype).itemsize)

    out = pl.pallas_call(
        kernel,
        out_shape=jax.ShapeDtypeStruct((nc, H, W), img.dtype),
        grid=(nc,),
        in_specs=[
            pl.BlockSpec((pl.Squeezed(), H, W), lambda i: (i, 0, 0)),
            pl.BlockSpec((H, H), lambda i: (0, 0)),   # resident across steps
            pl.BlockSpec((W, W), lambda i: (0, 0)),   # resident across steps
        ],
        out_specs=pl.BlockSpec((pl.Squeezed(), H, W), lambda i: (i, 0, 0)),
        compiler_params=pltpu.CompilerParams(
            dimension_semantics=("parallel",),
            vmem_limit_bytes=vmem_limit),
    )(x, bh, aw)

    return out.reshape(N, C, H, W)


def _filter_high_ref(img, *, recursions=1, kernel_size=5, normalize=True,
                     gaussian=False):
    """Pure-JAX reference mirroring the PyTorch module (stride=1), NCHW."""
    pad = (kernel_size - 1) // 2
    t1 = np.asarray(_taps_1d(kernel_size, gaussian), np.float64)
    taps2d = np.outer(t1, t1).astype(np.float32)

    def low(y):
        yp = jnp.pad(y.astype(jnp.float32),
                     ((0, 0), (0, 0), (pad, pad), (pad, pad)))
        Hh, Ww = y.shape[-2:]
        acc = jnp.zeros(y.shape, jnp.float32)
        for dy in range(kernel_size):
            for dx in range(kernel_size):
                acc = acc + float(taps2d[dy, dx]) * yp[..., dy:dy + Hh,
                                                       dx:dx + Ww]
        return acc

    x = img.astype(jnp.float32)
    for _ in range(recursions - 1):
        x = low(x)
    out = x - low(x)
    if normalize:
        out = 0.5 + 0.5 * out
    return out.astype(img.dtype)


if __name__ == "__main__":
    key = jax.random.PRNGKey(0)
    # Small NCHW image, 3 channels (module's intended RGB use), batch=2.
    x = jax.random.uniform(key, (2, 3, 16, 16), dtype=jnp.float32)

    configs = [
        dict(),                   # FilterHigh() defaults (avg-pool, normalize)
        dict(gaussian=True),      # Gaussian low-pass path
        dict(recursions=2),       # multi-recursion path (fused, no scratch)
        dict(normalize=False),    # raw high-pass
    ]
    for cfg in configs:
        out = jax.block_until_ready(filter_high(x, **cfg))
        ref = _filter_high_ref(x, **cfg)
        np.testing.assert_allclose(np.asarray(out), np.asarray(ref),
                                   rtol=1e-4, atol=1e-4)
        assert out.shape == x.shape and out.dtype == x.dtype
    print("KERNEL_OK")
</pallas_src>

<mosaic_0001>
module attributes {stable_mosaic.version = 11 : i64} {
  func.func @kernel(%arg0: i32, %arg1: memref<1x16x16xf32, #tpu.memory_space<vmem>>, %arg2: memref<16x16xf32, #tpu.memory_space<vmem>>, %arg3: memref<16x16xf32, #tpu.memory_space<vmem>>, %arg4: memref<1x16x16xf32, #tpu.memory_space<vmem>>) attributes {dimension_semantics = [#tpu.dimension_semantics<parallel>], iteration_bounds = array<i64: 6>, scalar_prefetch = 0 : i64, scratch_operands = 0 : i64, tpu.core_type = #tpu.core_type<tc>, window_params = [{transform_indices = @transform_0, window_bounds = array<i64: 1, 16, 16>}, {pipeline_mode = #tpu.pipeline_mode<synchronous>, transform_indices = @transform_1, window_bounds = array<i64: 16, 16>}, {pipeline_mode = #tpu.pipeline_mode<synchronous>, transform_indices = @transform_2, window_bounds = array<i64: 16, 16>}, {transform_indices = @transform_3, window_bounds = array<i64: 1, 16, 16>}]} {
    %c0 = arith.constant 0 : index
    %c0_0 = arith.constant 0 : index
    %c0_1 = arith.constant 0 : index
    %0 = vector.load %arg1[%c0, %c0_0, %c0_1] : memref<1x16x16xf32, #tpu.memory_space<vmem>>, vector<1x16x16xf32>
    %1 = vector.shape_cast %0 : vector<1x16x16xf32> to vector<16x16xf32>
    %c0_2 = arith.constant 0 : index
    %c0_3 = arith.constant 0 : index
    %2 = vector.load %arg2[%c0_2, %c0_3] : memref<16x16xf32, #tpu.memory_space<vmem>>, vector<16x16xf32>
    %c0_4 = arith.constant 0 : index
    %c0_5 = arith.constant 0 : index
    %3 = vector.load %arg3[%c0_4, %c0_5] : memref<16x16xf32, #tpu.memory_space<vmem>>, vector<16x16xf32>
    %cst = arith.constant dense<0.000000e+00> : vector<16x16xf32>
    %4 = tpu.matmul %1, %3, %cst {dimension_numbers = #tpu.dot_dimension_numbers<[1], [0], [0], [1], [0, 0, 1, 1], [], []>, precision = #tpu.contract_precision<fp32>} : vector<16x16xf32>, vector<16x16xf32>, vector<16x16xf32> -> vector<16x16xf32>
    %cst_6 = arith.constant dense<0.000000e+00> : vector<16x16xf32>
    %5 = tpu.matmul %2, %4, %cst_6 {dimension_numbers = #tpu.dot_dimension_numbers<[1], [0], [0], [1], [0, 0, 1, 1], [], []>, precision = #tpu.contract_precision<fp32>} : vector<16x16xf32>, vector<16x16xf32>, vector<16x16xf32> -> vector<16x16xf32>
    %6 = arith.subf %1, %5 : vector<16x16xf32>
    %cst_7 = arith.constant 5.000000e-01 : f32
    %7 = vector.broadcast %cst_7 : f32 to vector<16x16xf32>
    %8 = arith.mulf %7, %6 : vector<16x16xf32>
    %cst_8 = arith.constant 5.000000e-01 : f32
    %9 = vector.broadcast %cst_8 : f32 to vector<16x16xf32>
    %10 = arith.addf %9, %8 : vector<16x16xf32>
    %c0_9 = arith.constant 0 : index
    %c0_10 = arith.constant 0 : index
    %c0_11 = arith.constant 0 : index
    %11 = vector.load %arg4[%c0_9, %c0_10, %c0_11] : memref<1x16x16xf32, #tpu.memory_space<vmem>>, vector<1x16x16xf32>
    %12 = vector.shape_cast %11 : vector<1x16x16xf32> to vector<16x16xf32>
    %13 = vector.shape_cast %10 : vector<16x16xf32> to vector<1x16x16xf32>
    tpu.vector_store %arg4[%c0_9, %c0_10, %c0_11], %13 {strides = array<i32>} : memref<1x16x16xf32, #tpu.memory_space<vmem>>, vector<1x16x16xf32>,
    return
  }
  func.func @transform_0(%arg0: i32) -> (i32, i32, i32) {
    %c0_i32 = arith.constant 0 : i32
    %c0_i32_0 = arith.constant 0 : i32
    %c0_i32_1 = arith.constant 0 : i32
    return %arg0, %c0_i32, %c0_i32_0 : i32, i32, i32
  }
  func.func @transform_1(%arg0: i32) -> (i32, i32) {
    %c0_i32 = arith.constant 0 : i32
    %c0_i32_0 = arith.constant 0 : i32
    %c0_i32_1 = arith.constant 0 : i32
    return %c0_i32, %c0_i32_0 : i32, i32
  }
  func.func @transform_2(%arg0: i32) -> (i32, i32) {
    %c0_i32 = arith.constant 0 : i32
    %c0_i32_0 = arith.constant 0 : i32
    %c0_i32_1 = arith.constant 0 : i32
    return %c0_i32, %c0_i32_0 : i32, i32
  }
  func.func @transform_3(%arg0: i32) -> (i32, i32, i32) {
    %c0_i32 = arith.constant 0 : i32
    %c0_i32_0 = arith.constant 0 : i32
    %c0_i32_1 = arith.constant 0 : i32
    return %arg0, %c0_i32, %c0_i32_0 : i32, i32, i32
  }
}

</mosaic_0001>

<llo_original>
// kernel: tpu_custom_call.1
$region0: #{tpu_custom_call.1}
  #allocation0 [shape = 'u32[]', space=smem, size = 0x4, offset = 0x4, fixed_abs, tag = 'smem constant byte address 0x4 - core index']
  #allocation1 [shape = 'u32[72,128]{1,0:T(1,128)}', space=vmem, size = 0x9000, scoped, tag = 'internal scratch']
  %s0 = inlined_call_operand.hbm [shape: f32[6,16,16], index: 0, kind: input, shape index: {}]
  %s1 = inlined_call_operand.hbm [shape: f32[16,16], index: 1, kind: input, shape index: {}]
  %s2 = inlined_call_operand.hbm [shape: f32[16,16], index: 2, kind: input, shape index: {}]
  %s3 = inlined_call_operand.hbm [shape: f32[6,16,16], index: 3, kind: output, shape index: {}]
  %s4 = sld [smem:[#allocation0]]
  $region57: #{tpu_custom_call.1} parent=0
    _
  %s6 = ssub.s32 1, %s4
  %s7 = scalar_select 0, %s6, %s4
  $region1: #{tpu_custom_call.1} parent=0
    #allocation2 [shape = 'u8[16384]{0}', space=vmem, size = 0x4000, scoped, tag = 'input window, operand 0']
    #allocation3 [shape = 's32[2]{0}', space=sflag, size = 0x8, scoped, tag = 'scoped memory for tpu_custom_call.1']
    #allocation4 [shape = 's32[2]{0}', space=sflag, size = 0x8, scoped, tag = 'scoped memory for tpu_custom_call.1']
    #allocation5 [shape = 'u8[8192]{0}', space=vmem, size = 0x2000, scoped, tag = 'input window, operand 1, single buffered']
    #allocation6 [shape = 's32[1]{0}', space=sflag, size = 0x4, scoped, tag = 'scoped memory for tpu_custom_call.1']
    #allocation7 [shape = 'u8[8192]{0}', space=vmem, size = 0x2000, scoped, tag = 'input window, operand 2, single buffered']
    #allocation8 [shape = 'u8[16384]{0}', space=vmem, size = 0x4000, scoped, tag = 'output window, operand 0']
    %8 = vsyncpa [#allocation3], 0
    %s9 = scalar_lea.sflag [#allocation3], 1
    %10 = vsyncpa %s9, 0
    %11 = vsyncpa [#allocation6], 0
    %12 = vsyncpa [#allocation4], 0
    %s13 = scalar_lea.sflag [#allocation4], 1
    %14 = vsyncpa %s13, 0
    loop: start=0, step=1, limit=8
    $region2: #{tpu_custom_call.1} parent=1 // loop_pre_header
      _
    $region3: #{tpu_custom_call.1} parent=1 // loop_header
      %s16 = sphi 0, %s20
      %p17 = scmp.ge.s32.totalorder %s16, 8
      %s26 = sphi 0, %s28
      %s29 = sphi 0, %s26
      %s30 = sphi 0, %s29
      %s46 = sphi 0, %s30
      %s50 = sphi 0, %s50
      %s52 = sphi 0, %s50
      %s53 = sphi 0, %s52
      %s67 = sphi 0, %s53
      %s71 = sphi 0, %s71
      %s73 = sphi 0, %s71
      %s74 = sphi 0, %s73
      %s88 = sphi 0, %s74
      %s94 = sphi 0, %s96
      %s97 = sphi 0, %s94
      %s98 = sphi 0, %s97
      %s114 = sphi 0, %s98
    $region4: #{tpu_custom_call.1} parent=1 // loop_header_branch
      %19 = sbr.rel (%p17) target = $region8
    $region5: #{tpu_custom_call.1} parent=1 // loop_body
      %s21 = ssub.s32 %s16, 1
      %s22 = ssub.s32 %s16, 2
      %s23 = sadd.s32 %s16, 1
      %s24 = ssub.s32 %s16, %s23
      %p25 = scmp.eq.s32.totalorder %s24, 0
      %s27 = sadd.s32 %s26, 1
      %s28 = scalar_select %p25, %s26, %s27
      %p31 = pneg %p25
      %p32 = scmp.eq.s32.totalorder %s16, 5
      %p33 = por %p31, %p32
      %p34 = scmp.ne.s32.totalorder %s26, %s29
      %p35 = scmp.eq.s32.totalorder %s16, 0
      %p36 = por %p34, %p35
      %p37 = scmp.ne.s32.totalorder %s26, %s29
      %p38 = scmp.eq.s32.totalorder %s21, 5
      %p39 = por %p37, %p38
      %p40 = scmp.ne.s32.totalorder %s29, %s30
      %p41 = scmp.eq.s32.totalorder %s21, 0
      %p42 = por %p40, %p41
      %p43 = scmp.ne.s32.totalorder %s29, %s30
      %p44 = scmp.eq.s32.totalorder %s22, 5
      %p45 = por %p43, %p44
      %p47 = scmp.ne.s32.totalorder %s30, %s46
      %p48 = scmp.eq.s32.totalorder %s22, 0
      %p49 = por %p47, %p48
      %s51 = sadd.s32 %s50, 1
      %p54 = scmp.eq.s32.totalorder %s16, 5
      %p55 = scmp.ne.s32.totalorder %s50, %s52
      %p56 = scmp.eq.s32.totalorder %s16, 0
      %p57 = por %p55, %p56
      %p58 = scmp.ne.s32.totalorder %s50, %s52
      %p59 = scmp.eq.s32.totalorder %s21, 5
      %p60 = por %p58, %p59
      %p61 = scmp.ne.s32.totalorder %s52, %s53
      %p62 = scmp.eq.s32.totalorder %s21, 0
      %p63 = por %p61, %p62
      %p64 = scmp.ne.s32.totalorder %s52, %s53
      %p65 = scmp.eq.s32.totalorder %s22, 5
      %p66 = por %p64, %p65
      %p68 = scmp.ne.s32.totalorder %s53, %s67
      %p69 = scmp.eq.s32.totalorder %s22, 0
      %p70 = por %p68, %p69
      %s72 = sadd.s32 %s71, 1
      %p75 = scmp.eq.s32.totalorder %s16, 5
      %p76 = scmp.ne.s32.totalorder %s71, %s73
      %p77 = scmp.eq.s32.totalorder %s16, 0
      %p78 = por %p76, %p77
      %p79 = scmp.ne.s32.totalorder %s71, %s73
      %p80 = scmp.eq.s32.totalorder %s21, 5
      %p81 = por %p79, %p80
      %p82 = scmp.ne.s32.totalorder %s73, %s74
      %p83 = scmp.eq.s32.totalorder %s21, 0
      %p84 = por %p82, %p83
      %p85 = scmp.ne.s32.totalorder %s73, %s74
      %p86 = scmp.eq.s32.totalorder %s22, 5
      %p87 = por %p85, %p86
      %p89 = scmp.ne.s32.totalorder %s74, %s88
      %p90 = scmp.eq.s32.totalorder %s22, 0
      %p91 = por %p89, %p90
      %s92 = ssub.s32 %s16, %s23
      %p93 = scmp.eq.s32.totalorder %s92, 0
      %s95 = sadd.s32 %s94, 1
      %s96 = scalar_select %p93, %s94, %s95
      %p99 = pneg %p93
      %p100 = scmp.eq.s32.totalorder %s16, 5
      %p101 = por %p99, %p100
      %p102 = scmp.ne.s32.totalorder %s94, %s97
      %p103 = scmp.eq.s32.totalorder %s16, 0
      %p104 = por %p102, %p103
      %p105 = scmp.ne.s32.totalorder %s94, %s97
      %p106 = scmp.eq.s32.totalorder %s21, 5
      %p107 = por %p105, %p106
      %p108 = scmp.ne.s32.totalorder %s97, %s98
      %p109 = scmp.eq.s32.totalorder %s21, 0
      %p110 = por %p108, %p109
      %p111 = scmp.ne.s32.totalorder %s97, %s98
      %p112 = scmp.eq.s32.totalorder %s22, 5
      %p113 = por %p111, %p112
      %p115 = scmp.ne.s32.totalorder %s98, %s114
      %p116 = scmp.eq.s32.totalorder %s22, 0
      %p117 = por %p115, %p116
      %p118 = scmp.le.s32.totalorder 1, %s16
      %p119 = scmp.lt.s32.totalorder %s16, 7
      %p120 = pnand %p118, %p119
      %p121 = pneg %p120
      // Predicated region
      $region9: #{tpu_custom_call.1} parent=5 // pred_check
        _
      $region10: #{tpu_custom_call.1} parent=5 // pred_check_branch
        %123 = sbr.rel (%p120) target = $region12
      $region11: #{tpu_custom_call.1} parent=5 // pred_region
        %s124 = ssub.s32 %s16, 1
        // Predicated region
        $region13: #{tpu_custom_call.1} parent=11 // pred_check
          %p125 = pneg %p63
        $region14: #{tpu_custom_call.1} parent=11 // pred_check_branch
          %127 = sbr.rel (%p125) target = $region16
        $region15: #{tpu_custom_call.1} parent=11 // pred_region
          %129 = vsyncadd [#allocation6], 0
          %s130 = sshll.u32 %s1, 4
          %s131 = int_to_ptr.hbm [resolvable:$true] %s130
          %s132 = sshll.u32 [#allocation5], 4
          %s133 = int_to_ptr.vmem [resolvable:$true] %s132
          %138 = dma.hbm_to_vmem [thread:$0]  %s131, 256, %s133, [#allocation6], 128, 128, 8
        $region16: #{tpu_custom_call.1} parent=11 // pred_fallthru
          _
        // Predicated region
        $region17: #{tpu_custom_call.1} parent=11 // pred_check
          %p139 = pneg %p84
        $region18: #{tpu_custom_call.1} parent=11 // pred_check_branch
          %141 = sbr.rel (%p139) target = $region20
        $region19: #{tpu_custom_call.1} parent=11 // pred_region
          %143 = vsyncadd [#allocation6], 0
          %s144 = sshll.u32 %s2, 4
          %s145 = int_to_ptr.hbm [resolvable:$true] %s144
          %s146 = sshll.u32 [#allocation7], 4
          %s147 = int_to_ptr.vmem [resolvable:$true] %s146
          %152 = dma.hbm_to_vmem [thread:$0]  %s145, 256, %s147, [#allocation6], 128, 128, 8
        $region20: #{tpu_custom_call.1} parent=11 // pred_fallthru
          _
      $region12: #{tpu_custom_call.1} parent=5 // pred_fallthru
        _
      %p153 = scmp.lt.s32.totalorder %s16, 6
      // Predicated region
      $region21: #{tpu_custom_call.1} parent=5 // pred_check
        %p154 = pneg %p153
      $region22: #{tpu_custom_call.1} parent=5 // pred_check_branch
        %156 = sbr.rel (%p154) target = $region24
      $region23: #{tpu_custom_call.1} parent=5 // pred_region
        // Predicated region
        $region25: #{tpu_custom_call.1} parent=23 // pred_check
          %p157 = pneg %p36
        $region26: #{tpu_custom_call.1} parent=23 // pred_check_branch
          %159 = sbr.rel (%p157) target = $region28
        $region27: #{tpu_custom_call.1} parent=23 // pred_region
          %s160 = sand.u32 %s26, 1
          %s161 = scalar_lea.sflag [#allocation3], %s160
          %s162 = sand.u32 %s26, 1
          %s163 = smul.addr %s162, 16
          %s164 = scalar_lea.vmem [#allocation2], %s163
          %166 = vsyncadd %s161, 0
          %s167 = smul.addr %s16, 2
          %s168 = smul.addr %s167, 8
          %s169 = scalar_lea.hbm %s0, %s168
          %s170 = sshll.u32 %s169, 4
          %s171 = int_to_ptr.hbm [resolvable:$true] %s170
          %s172 = sshll.u32 %s164, 4
          %s173 = int_to_ptr.vmem [resolvable:$true] %s172
          %178 = dma.hbm_to_vmem [thread:$0]  %s171, 256, %s173, %s161, 128, 128, 8
        $region28: #{tpu_custom_call.1} parent=23 // pred_fallthru
          _
      $region24: #{tpu_custom_call.1} parent=5 // pred_fallthru
        _
      %p179 = scmp.le.s32.totalorder 1, %s16
      %p180 = scmp.lt.s32.totalorder %s16, 7
      %p181 = pnand %p179, %p180
      %p182 = pneg %p181
      // Predicated region
      $region29: #{tpu_custom_call.1} parent=5 // pred_check
        _
      $region30: #{tpu_custom_call.1} parent=5 // pred_check_branch
        %184 = sbr.rel (%p181) target = $region32
      $region31: #{tpu_custom_call.1} parent=5 // pred_region
        %s185 = ssub.s32 %s16, 1
        %s186 = sand.u32 %s29, 1
        %s187 = scalar_lea.sflag [#allocation3], %s186
        %s188 = sand.u32 %s29, 1
        %s189 = smul.addr %s188, 16
        %s190 = scalar_lea.vmem [#allocation2], %s189
        // Predicated region
        $region33: #{tpu_custom_call.1} parent=31 // pred_check
          %p191 = pneg %p42
        $region34: #{tpu_custom_call.1} parent=31 // pred_check_branch
          %193 = sbr.rel (%p191) target = $region36
        $region35: #{tpu_custom_call.1} parent=31 // pred_region
          %195 = dma.done %s187, 256
        $region36: #{tpu_custom_call.1} parent=31 // pred_fallthru
          _
        // Predicated region
        $region37: #{tpu_custom_call.1} parent=31 // pred_check
          %p196 = pneg %p63
        $region38: #{tpu_custom_call.1} parent=31 // pred_check_branch
          %198 = sbr.rel (%p196) target = $region40
        $region39: #{tpu_custom_call.1} parent=31 // pred_region
          %200 = dma.done [#allocation6], 256
        $region40: #{tpu_custom_call.1} parent=31 // pred_fallthru
          _
        // Predicated region
        $region41: #{tpu_custom_call.1} parent=31 // pred_check
          %p201 = pneg %p84
        $region42: #{tpu_custom_call.1} parent=31 // pred_check_branch
          %203 = sbr.rel (%p201) target = $region44
        $region43: #{tpu_custom_call.1} parent=31 // pred_region
          %205 = dma.done [#allocation6], 256
        $region44: #{tpu_custom_call.1} parent=31 // pred_fallthru
          _
        %s206 = sand.u32 %s29, 1
        %s207 = scalar_lea.sflag [#allocation3], %s206
        %s208 = sand.u32 %s29, 1
        %s209 = smul.addr %s208, 16
        %s210 = scalar_lea.vmem [#allocation2], %s209
        %p211 = pneg %p42
        %p212 = pneg %p39
        %p213 = pneg %p63
        %p214 = pneg %p60
        %p215 = pneg %p84
        %p216 = pneg %p81
        %p217 = pneg %p110
        %p218 = pneg %p107
        %s219 = sand.u32 %s97, 1
        %s220 = scalar_lea.sflag [#allocation4], %s219
        %s221 = sand.u32 %s97, 1
        %s222 = smul.addr %s221, 16
        %s223 = scalar_lea.vmem [#allocation8], %s222
        %v224 = vld [vmem:[%s190] sm:$0xff]
        %v225 = vld [vmem:[%s190 + $0x8] sm:$0xff]
        %v226 = vld [vmem:[#allocation5] sm:$0xff]
        %v227 = vld [vmem:[#allocation5 + $0x8] sm:$0xff]
        %v228 = vld [vmem:[#allocation7] sm:$0xff]
        %v229 = vld [vmem:[#allocation7 + $0x8] sm:$0xff]
        %vm230 = vcmask 130048
        %v232 = vsel %vm230, %v224, 0
        %v235 = vsel %vm230, %v225, 0
        %237 = vmatpush.msra.mxu0 0.0
        %238 = vmatpush.msra.mxu0 0.0
        %239 = vmatpush.msra.mxu0 0.0
        %240 = vmatpush.msra.mxu0 0.0
        %241 = vmatpush.msra.mxu0 0.0
        %242 = vmatpush.msra.mxu0 0.0
        %243 = vmatpush.msra.mxu0 0.0
        %244 = vmatpush.msra.mxu0 0.0
        %245 = vmatpush.msra.mxu0 0.0
        %246 = vmatpush.msra.mxu0 0.0
        %247 = vmatpush.msra.mxu0 0.0
        %248 = vmatpush.msra.mxu0 0.0
        %249 = vmatpush.msra.mxu0 0.0
        %250 = vmatpush.msra.mxu0 0.0
        %v251 = vand.u32 %v229, 4294901760
        %252 = vmatpush.msra.mxu0 %v251
        %v253 = vand.u32 %v228, 4294901760
        %254 = vmatpush.msra.mxu0 %v253
        %v255 = vand.u32 %v232, 4294901760
        %v256 = vsub.f32 %v232, %v255
        %v257 = vand.u32 %v256, 4294901760
        %v258 = vsub.f32 %v256, %v257
        %v259 = vand.u32 %v258, 4294901760
        %260 = vmatmul.f32.gmra.mxu0 %v259
        %v261 = vpop.f32.mrf.mxu0
        %v262 = vadd.f32 0.0, %v261
        %v263 = vand.u32 %v235, 4294901760
        %v264 = vsub.f32 %v235, %v263
        %v265 = vand.u32 %v264, 4294901760
        %v266 = vsub.f32 %v264, %v265
        %v267 = vand.u32 %v266, 4294901760
        %268 = vmatmul.f32.gmra.mxu0 %v267
        %v269 = vpop.f32.mrf.mxu0
        %v270 = vadd.f32 0.0, %v269
        %271 = vdwg.mxu0
        %272 = vmatpush.msra.mxu0 0.0
        %273 = vmatpush.msra.mxu0 0.0
        %274 = vmatpush.msra.mxu0 0.0
        %275 = vmatpush.msra.mxu0 0.0
        %276 = vmatpush.msra.mxu0 0.0
        %277 = vmatpush.msra.mxu0 0.0
        %278 = vmatpush.msra.mxu0 0.0
        %279 = vmatpush.msra.mxu0 0.0
        %280 = vmatpush.msra.mxu0 0.0
        %281 = vmatpush.msra.mxu0 0.0
        %282 = vmatpush.msra.mxu0 0.0
        %283 = vmatpush.msra.mxu0 0.0
        %284 = vmatpush.msra.mxu0 0.0
        %285 = vmatpush.msra.mxu0 0.0
        %v286 = vand.u32 %v229, 4294901760
        %v287 = vsub.f32 %v229, %v286
        %v288 = vand.u32 %v287, 4294901760
        %v289 = vsub.f32 %v287, %v288
        %v290 = vand.u32 %v289, 4294901760
        %291 = vmatpush.msra.mxu0 %v290
        %v292 = vand.u32 %v228, 4294901760
        %v293 = vsub.f32 %v228, %v292
        %v294 = vand.u32 %v293, 4294901760
        %v295 = vsub.f32 %v293, %v294
        %v296 = vand.u32 %v295, 4294901760
        %297 = vmatpush.msra.mxu0 %v296
        %v298 = vand.u32 %v232, 4294901760
        %299 = vmatmul.f32.gmra.mxu0 %v298
        %v300 = vpop.f32.mrf.mxu0
        %v301 = vadd.f32 %v262, %v300
        %v302 = vand.u32 %v235, 4294901760
        %303 = vmatmul.f32.gmra.mxu0 %v302
        %v304 = vpop.f32.mrf.mxu0
        %v305 = vadd.f32 %v270, %v304
        %306 = vdwg.mxu0
        %307 = vmatpush.msra.mxu0 0.0
        %308 = vmatpush.msra.mxu0 0.0
        %309 = vmatpush.msra.mxu0 0.0
        %310 = vmatpush.msra.mxu0 0.0
        %311 = vmatpush.msra.mxu0 0.0
        %312 = vmatpush.msra.mxu0 0.0
        %313 = vmatpush.msra.mxu0 0.0
        %314 = vmatpush.msra.mxu0 0.0
        %315 = vmatpush.msra.mxu0 0.0
        %316 = vmatpush.msra.mxu0 0.0
        %317 = vmatpush.msra.mxu0 0.0
        %318 = vmatpush.msra.mxu0 0.0
        %319 = vmatpush.msra.mxu0 0.0
        %320 = vmatpush.msra.mxu0 0.0
        %v321 = vand.u32 %v229, 4294901760
        %v322 = vsub.f32 %v229, %v321
        %323 = vmatpush.msra.mxu0 %v322
        %v324 = vand.u32 %v228, 4294901760
        %v325 = vsub.f32 %v228, %v324
        %326 = vmatpush.msra.mxu0 %v325
        %v327 = vand.u32 %v232, 4294901760
        %v328 = vsub.f32 %v232, %v327
        %329 = vmatmul.f32.gmra.mxu0 %v328
        %v330 = vpop.f32.mrf.mxu0
        %v331 = vadd.f32 %v301, %v330
        %v332 = vand.u32 %v235, 4294901760
        %v333 = vsub.f32 %v235, %v332
        %334 = vmatmul.f32.gmra.mxu0 %v333
        %v335 = vpop.f32.mrf.mxu0
        %v336 = vadd.f32 %v305, %v335
        %337 = vdwg.mxu0
        %338 = vmatpush.msra.mxu0 0.0
        %339 = vmatpush.msra.mxu0 0.0
        %340 = vmatpush.msra.mxu0 0.0
        %341 = vmatpush.msra.mxu0 0.0
        %342 = vmatpush.msra.mxu0 0.0
        %343 = vmatpush.msra.mxu0 0.0
        %344 = vmatpush.msra.mxu0 0.0
        %345 = vmatpush.msra.mxu0 0.0
        %346 = vmatpush.msra.mxu0 0.0
        %347 = vmatpush.msra.mxu0 0.0
        %348 = vmatpush.msra.mxu0 0.0
        %349 = vmatpush.msra.mxu0 0.0
        %350 = vmatpush.msra.mxu0 0.0
        %351 = vmatpush.msra.mxu0 0.0
        %v352 = vand.u32 %v229, 4294901760
        %353 = vmatpush.msra.mxu0 %v352
        %v354 = vand.u32 %v228, 4294901760
        %355 = vmatpush.msra.mxu0 %v354
        %v356 = vand.u32 %v232, 4294901760
        %v357 = vsub.f32 %v232, %v356
        %v358 = vand.u32 %v357, 4294901760
        %359 = vmatmul.f32.gmra.mxu0 %v358
        %v360 = vpop.f32.mrf.mxu0
        %v361 = vadd.f32 %v331, %v360
        %v362 = vand.u32 %v235, 4294901760
        %v363 = vsub.f32 %v235, %v362
        %v364 = vand.u32 %v363, 4294901760
        %365 = vmatmul.f32.gmra.mxu0 %v364
        %v366 = vpop.f32.mrf.mxu0
        %v367 = vadd.f32 %v336, %v366
        %368 = vdwg.mxu0
        %369 = vmatpush.msra.mxu0 0.0
        %370 = vmatpush.msra.mxu0 0.0
        %371 = vmatpush.msra.mxu0 0.0
        %372 = vmatpush.msra.mxu0 0.0
        %373 = vmatpush.msra.mxu0 0.0
        %374 = vmatpush.msra.mxu0 0.0
        %375 = vmatpush.msra.mxu0 0.0
        %376 = vmatpush.msra.mxu0 0.0
        %377 = vmatpush.msra.mxu0 0.0
        %378 = vmatpush.msra.mxu0 0.0
        %379 = vmatpush.msra.mxu0 0.0
        %380 = vmatpush.msra.mxu0 0.0
        %381 = vmatpush.msra.mxu0 0.0
        %382 = vmatpush.msra.mxu0 0.0
        %v383 = vand.u32 %v229, 4294901760
        %v384 = vsub.f32 %v229, %v383
        %v385 = vand.u32 %v384, 4294901760
        %386 = vmatpush.msra.mxu0 %v385
        %v387 = vand.u32 %v228, 4294901760
        %v388 = vsub.f32 %v228, %v387
        %v389 = vand.u32 %v388, 4294901760
        %390 = vmatpush.msra.mxu0 %v389
        %v391 = vand.u32 %v232, 4294901760
        %392 = vmatmul.f32.gmra.mxu0 %v391
        %v393 = vpop.f32.mrf.mxu0
        %v394 = vadd.f32 %v361, %v393
        %v395 = vand.u32 %v235, 4294901760
        %396 = vmatmul.f32.gmra.mxu0 %v395
        %v397 = vpop.f32.mrf.mxu0
        %v398 = vadd.f32 %v367, %v397
        %399 = vdwg.mxu0
        %400 = vmatpush.msra.mxu0 0.0
        %401 = vmatpush.msra.mxu0 0.0
        %402 = vmatpush.msra.mxu0 0.0
        %403 = vmatpush.msra.mxu0 0.0
        %404 = vmatpush.msra.mxu0 0.0
        %405 = vmatpush.msra.mxu0 0.0
        %406 = vmatpush.msra.mxu0 0.0
        %407 = vmatpush.msra.mxu0 0.0
        %408 = vmatpush.msra.mxu0 0.0
        %409 = vmatpush.msra.mxu0 0.0
        %410 = vmatpush.msra.mxu0 0.0
        %411 = vmatpush.msra.mxu0 0.0
        %412 = vmatpush.msra.mxu0 0.0
        %413 = vmatpush.msra.mxu0 0.0
        %v414 = vand.u32 %v229, 4294901760
        %415 = vmatpush.msra.mxu0 %v414
        %v416 = vand.u32 %v228, 4294901760
        %417 = vmatpush.msra.mxu0 %v416
        %v418 = vand.u32 %v232, 4294901760
        %419 = vmatmul.f32.gmra.mxu0 %v418
        %v420 = vpop.f32.mrf.mxu0
        %v421 = vadd.f32 %v394, %v420
        %v422 = vand.u32 %v235, 4294901760
        %423 = vmatmul.f32.gmra.mxu0 %v422
        %v424 = vpop.f32.mrf.mxu0
        %v425 = vadd.f32 %v398, %v424
        %426 = vdwg.mxu0
        %v428 = vsel %vm230, %v226, 0
        %v431 = vsel %vm230, %v227, 0
        %433 = vmatpush.msra.mxu0 0.0
        %434 = vmatpush.msra.mxu0 0.0
        %435 = vmatpush.msra.mxu0 0.0
        %436 = vmatpush.msra.mxu0 0.0
        %437 = vmatpush.msra.mxu0 0.0
        %438 = vmatpush.msra.mxu0 0.0
        %439 = vmatpush.msra.mxu0 0.0
        %440 = vmatpush.msra.mxu0 0.0
        %441 = vmatpush.msra.mxu0 0.0
        %442 = vmatpush.msra.mxu0 0.0
        %443 = vmatpush.msra.mxu0 0.0
        %444 = vmatpush.msra.mxu0 0.0
        %445 = vmatpush.msra.mxu0 0.0
        %446 = vmatpush.msra.mxu0 0.0
        %v447 = vand.u32 %v425, 4294901760
        %448 = vmatpush.msra.mxu0 %v447
        %v449 = vand.u32 %v421, 4294901760
        %450 = vmatpush.msra.mxu0 %v449
        %v451 = vand.u32 %v428, 4294901760
        %v452 = vsub.f32 %v428, %v451
        %v453 = vand.u32 %v452, 4294901760
        %v454 = vsub.f32 %v452, %v453
        %v455 = vand.u32 %v454, 4294901760
        %456 = vmatmul.f32.gmra.mxu0 %v455
        %v457 = vpop.f32.mrf.mxu0
        %v458 = vadd.f32 0.0, %v457
        %v459 = vand.u32 %v431, 4294901760
        %v460 = vsub.f32 %v431, %v459
        %v461 = vand.u32 %v460, 4294901760
        %v462 = vsub.f32 %v460, %v461
        %v463 = vand.u32 %v462, 4294901760
        %464 = vmatmul.f32.gmra.mxu0 %v463
        %v465 = vpop.f32.mrf.mxu0
        %v466 = vadd.f32 0.0, %v465
        %467 = vdwg.mxu0
        %468 = vmatpush.msra.mxu0 0.0
        %469 = vmatpush.msra.mxu0 0.0
        %470 = vmatpush.msra.mxu0 0.0
        %471 = vmatpush.msra.mxu0 0.0
        %472 = vmatpush.msra.mxu0 0.0
        %473 = vmatpush.msra.mxu0 0.0
        %474 = vmatpush.msra.mxu0 0.0
        %475 = vmatpush.msra.mxu0 0.0
        %476 = vmatpush.msra.mxu0 0.0
        %477 = vmatpush.msra.mxu0 0.0
        %478 = vmatpush.msra.mxu0 0.0
        %479 = vmatpush.msra.mxu0 0.0
        %480 = vmatpush.msra.mxu0 0.0
        %481 = vmatpush.msra.mxu0 0.0
        %v482 = vand.u32 %v425, 4294901760
        %v483 = vsub.f32 %v425, %v482
        %v484 = vand.u32 %v483, 4294901760
        %v485 = vsub.f32 %v483, %v484
        %v486 = vand.u32 %v485, 4294901760
        %487 = vmatpush.msra.mxu0 %v486
        %v488 = vand.u32 %v421, 4294901760
        %v489 = vsub.f32 %v421, %v488
        %v490 = vand.u32 %v489, 4294901760
        %v491 = vsub.f32 %v489, %v490
        %v492 = vand.u32 %v491, 4294901760
        %493 = vmatpush.msra.mxu0 %v492
        %v494 = vand.u32 %v428, 4294901760
        %495 = vmatmul.f32.gmra.mxu0 %v494
        %v496 = vpop.f32.mrf.mxu0
        %v497 = vadd.f32 %v458, %v496
        %v498 = vand.u32 %v431, 4294901760
        %499 = vmatmul.f32.gmra.mxu0 %v498
        %v500 = vpop.f32.mrf.mxu0
        %v501 = vadd.f32 %v466, %v500
        %502 = vdwg.mxu0
        %503 = vmatpush.msra.mxu0 0.0
        %504 = vmatpush.msra.mxu0 0.0
        %505 = vmatpush.msra.mxu0 0.0
        %506 = vmatpush.msra.mxu0 0.0
        %507 = vmatpush.msra.mxu0 0.0
        %508 = vmatpush.msra.mxu0 0.0
        %509 = vmatpush.msra.mxu0 0.0
        %510 = vmatpush.msra.mxu0 0.0
        %511 = vmatpush.msra.mxu0 0.0
        %512 = vmatpush.msra.mxu0 0.0
        %513 = vmatpush.msra.mxu0 0.0
        %514 = vmatpush.msra.mxu0 0.0
        %515 = vmatpush.msra.mxu0 0.0
        %516 = vmatpush.msra.mxu0 0.0
        %v517 = vand.u32 %v425, 4294901760
        %v518 = vsub.f32 %v425, %v517
        %519 = vmatpush.msra.mxu0 %v518
        %v520 = vand.u32 %v421, 4294901760
        %v521 = vsub.f32 %v421, %v520
        %522 = vmatpush.msra.mxu0 %v521
        %v523 = vand.u32 %v428, 4294901760
        %v524 = vsub.f32 %v428, %v523
        %525 = vmatmul.f32.gmra.mxu0 %v524
        %v526 = vpop.f32.mrf.mxu0
        %v527 = vadd.f32 %v497, %v526
        %v528 = vand.u32 %v431, 4294901760
        %v529 = vsub.f32 %v431, %v528
        %530 = vmatmul.f32.gmra.mxu0 %v529
        %v531 = vpop.f32.mrf.mxu0
        %v532 = vadd.f32 %v501, %v531
        %533 = vdwg.mxu0
        %534 = vmatpush.msra.mxu0 0.0
        %535 = vmatpush.msra.mxu0 0.0
        %536 = vmatpush.msra.mxu0 0.0
        %537 = vmatpush.msra.mxu0 0.0
        %538 = vmatpush.msra.mxu0 0.0
        %539 = vmatpush.msra.mxu0 0.0
        %540 = vmatpush.msra.mxu0 0.0
        %541 = vmatpush.msra.mxu0 0.0
        %542 = vmatpush.msra.mxu0 0.0
        %543 = vmatpush.msra.mxu0 0.0
        %544 = vmatpush.msra.mxu0 0.0
        %545 = vmatpush.msra.mxu0 0.0
        %546 = vmatpush.msra.mxu0 0.0
        %547 = vmatpush.msra.mxu0 0.0
        %v548 = vand.u32 %v425, 4294901760
        %549 = vmatpush.msra.mxu0 %v548
        %v550 = vand.u32 %v421, 4294901760
        %551 = vmatpush.msra.mxu0 %v550
        %v552 = vand.u32 %v428, 4294901760
        %v553 = vsub.f32 %v428, %v552
        %v554 = vand.u32 %v553, 4294901760
        %555 = vmatmul.f32.gmra.mxu0 %v554
        %v556 = vpop.f32.mrf.mxu0
        %v557 = vadd.f32 %v527, %v556
        %v558 = vand.u32 %v431, 4294901760
        %v559 = vsub.f32 %v431, %v558
        %v560 = vand.u32 %v559, 4294901760
        %561 = vmatmul.f32.gmra.mxu0 %v560
        %v562 = vpop.f32.mrf.mxu0
        %v563 = vadd.f32 %v532, %v562
        %564 = vdwg.mxu0
        %565 = vmatpush.msra.mxu0 0.0
        %566 = vmatpush.msra.mxu0 0.0
        %567 = vmatpush.msra.mxu0 0.0
        %568 = vmatpush.msra.mxu0 0.0
        %569 = vmatpush.msra.mxu0 0.0
        %570 = vmatpush.msra.mxu0 0.0
        %571 = vmatpush.msra.mxu0 0.0
        %572 = vmatpush.msra.mxu0 0.0
        %573 = vmatpush.msra.mxu0 0.0
        %574 = vmatpush.msra.mxu0 0.0
        %575 = vmatpush.msra.mxu0 0.0
        %576 = vmatpush.msra.mxu0 0.0
        %577 = vmatpush.msra.mxu0 0.0
        %578 = vmatpush.msra.mxu0 0.0
        %v579 = vand.u32 %v425, 4294901760
        %v580 = vsub.f32 %v425, %v579
        %v581 = vand.u32 %v580, 4294901760
        %582 = vmatpush.msra.mxu0 %v581
        %v583 = vand.u32 %v421, 4294901760
        %v584 = vsub.f32 %v421, %v583
        %v585 = vand.u32 %v584, 4294901760
        %586 = vmatpush.msra.mxu0 %v585
        %v587 = vand.u32 %v428, 4294901760
        %588 = vmatmul.f32.gmra.mxu0 %v587
        %v589 = vpop.f32.mrf.mxu0
        %v590 = vadd.f32 %v557, %v589
        %v591 = vand.u32 %v431, 4294901760
        %592 = vmatmul.f32.gmra.mxu0 %v591
        %v593 = vpop.f32.mrf.mxu0
        %v594 = vadd.f32 %v563, %v593
        %595 = vdwg.mxu0
        %596 = vmatpush.msra.mxu0 0.0
        %597 = vmatpush.msra.mxu0 0.0
        %598 = vmatpush.msra.mxu0 0.0
        %599 = vmatpush.msra.mxu0 0.0
        %600 = vmatpush.msra.mxu0 0.0
        %601 = vmatpush.msra.mxu0 0.0
        %602 = vmatpush.msra.mxu0 0.0
        %603 = vmatpush.msra.mxu0 0.0
        %604 = vmatpush.msra.mxu0 0.0
        %605 = vmatpush.msra.mxu0 0.0
        %606 = vmatpush.msra.mxu0 0.0
        %607 = vmatpush.msra.mxu0 0.0
        %608 = vmatpush.msra.mxu0 0.0
        %609 = vmatpush.msra.mxu0 0.0
        %v610 = vand.u32 %v425, 4294901760
        %611 = vmatpush.msra.mxu0 %v610
        %v612 = vand.u32 %v421, 4294901760
        %613 = vmatpush.msra.mxu0 %v612
        %v614 = vand.u32 %v428, 4294901760
        %615 = vmatmul.f32.gmra.mxu0 %v614
        %v616 = vpop.f32.mrf.mxu0
        %v617 = vadd.f32 %v590, %v616
        %v618 = vand.u32 %v431, 4294901760
        %619 = vmatmul.f32.gmra.mxu0 %v618
        %v620 = vpop.f32.mrf.mxu0
        %v621 = vadd.f32 %v594, %v620
        %622 = vdwg.mxu0
        %v623 = vsub.f32 %v224, %v617
        %v624 = vsub.f32 %v225, %v621
        %v625 = vmul.f32 %v623, 0.5
        %v626 = vmul.f32 %v624, 0.5
        %v627 = vadd.f32 %v625, 0.5
        %v628 = vadd.f32 %v626, 0.5
        %629 = vst.msk [vmem:[%s223] sm:$0xff] %vm230, %v627
        %630 = vst.msk [vmem:[%s223 + $0x8] sm:$0xff] %vm230, %v628
        %s631 = sand.u32 %s97, 1
        %s632 = scalar_lea.sflag [#allocation4], %s631
        %s633 = sand.u32 %s97, 1
        %s634 = smul.addr %s633, 16
        %s635 = scalar_lea.vmem [#allocation8], %s634
        // Predicated region
        $region45: #{tpu_custom_call.1} parent=31 // pred_check
          %p636 = pneg %p107
        $region46: #{tpu_custom_call.1} parent=31 // pred_check_branch
          %638 = sbr.rel (%p636) target = $region48
        $region47: #{tpu_custom_call.1} parent=31 // pred_region
          %640 = vsyncadd %s632, 0
          %s641 = smul.addr %s21, 2
          %s642 = smul.addr %s641, 8
          %s643 = scalar_lea.hbm %s3, %s642
          %s644 = sshll.u32 %s635, 4
          %s645 = int_to_ptr.vmem [resolvable:$true] %s644
          %s646 = sshll.u32 %s643, 4
          %s647 = int_to_ptr.hbm [resolvable:$true] %s646
          %652 = dma.vmem_to_hbm [thread:$0]  %s645, 256, %s647, %s632, 128, 128, 8
        $region48: #{tpu_custom_call.1} parent=31 // pred_fallthru
          _
      $region32: #{tpu_custom_call.1} parent=5 // pred_fallthru
        _
      %p653 = scmp.le.s32.totalorder 2, %s16
      // Predicated region
      $region49: #{tpu_custom_call.1} parent=5 // pred_check
        %p654 = pneg %p653
      $region50: #{tpu_custom_call.1} parent=5 // pred_check_branch
        %656 = sbr.rel (%p654) target = $region52
      $region51: #{tpu_custom_call.1} parent=5 // pred_region
        %s657 = ssub.s32 %s16, 2
        // Predicated region
        $region53: #{tpu_custom_call.1} parent=51 // pred_check
          %p658 = pneg %p113
        $region54: #{tpu_custom_call.1} parent=51 // pred_check_branch
          %660 = sbr.rel (%p658) target = $region56
        $region55: #{tpu_custom_call.1} parent=51 // pred_region
          %s661 = sand.u32 %s98, 1
          %s662 = scalar_lea.sflag [#allocation4], %s661
          %s663 = sand.u32 %s98, 1
          %s664 = smul.addr %s663, 16
          %s665 = scalar_lea.vmem [#allocation8], %s664
          %667 = dma.done %s662, 256
        $region56: #{tpu_custom_call.1} parent=51 // pred_fallthru
          _
      $region52: #{tpu_custom_call.1} parent=5 // pred_fallthru
        _
    $region6: #{tpu_custom_call.1} parent=1 // loop_footer
      %s20 = sadd.s32 1, %s16
    $region7: #{tpu_custom_call.1} parent=1 // loop_footer_branch
      %15 = sbr.rel target = $region3
    $region8: #{tpu_custom_call.1} parent=1 // loop_exit
      _
    %668 = vsyncpa [#allocation3], 1
    %s669 = scalar_lea.sflag [#allocation3], 1
    %670 = vsyncpa %s669, 1
    %671 = vsyncpa [#allocation6], 1
    %672 = vsyncpa [#allocation4], 1
    %s673 = scalar_lea.sflag [#allocation4], 1
    %674 = vsyncpa %s673, 1

</llo_original>
